<compile_context>
chip_gen: v7x
topology: tpu7x:2x2x1
jax: 0.10.0
libtpu: 0.0.40
codegen_flags: <defaults>
</compile_context>

<pallas_src>
import functools

import jax
import jax.numpy as jnp
from jax import lax
from jax.experimental import pallas as pl
from jax.experimental.pallas import tpu as pltpu


def _aspp_matmul_kernel(xcol_ref, w_ref, o_ref):
    """Single-dot atrous-conv kernel (one batch element per grid step).

    xcol_ref: (1, K, HW)    im2col'd input, K = KH*KW*Cin, HW = Hout*Wout (lanes)
    w_ref:    (Cout, K)     reshaped conv weight
    o_ref:    (1, Cout, HW) lane-dense output (HW on the 128-lane axis)
    """
    acc = jnp.dot(
        w_ref[...], xcol_ref[0], preferred_element_type=jnp.float32
    )  # (Cout, HW): one MXU matmul, dense lanes on both operands and result
    o_ref[0] = acc.astype(o_ref.dtype)


@functools.partial(jax.jit, static_argnames=("padding", "dilation"))
def aspp_module_gt(x_nchw, weight_oihw, *, padding, dilation):
    """Forward of _ASPPModulegt: x -> atrous_conv(x) (no bias, no BN/act).

    Input and output are NCHW, matching the PyTorch module.
    """
    N, Cin, H, W = x_nchw.shape
    Cout, _, KH, KW = weight_oihw.shape

    Hout = H + 2 * padding - dilation * (KH - 1)
    Wout = W + 2 * padding - dilation * (KW - 1)
    K = KH * KW * Cin
    HW = Hout * Wout

    # --- wrapper-side im2col (static shifted windows of the padded input) ---
    # Stays NCHW the whole way; the transposed matmul below makes the kernel
    # output already (Cout, Hout*Wout) == NCHW, so no output transpose exists.
    xp = jnp.pad(
        x_nchw, ((0, 0), (0, 0), (padding, padding), (padding, padding))
    )
    taps = []
    for kh in range(KH):
        for kw in range(KW):
            h0 = kh * dilation
            w0 = kw * dilation
            taps.append(xp[:, :, h0:h0 + Hout, w0:w0 + Wout])  # (N,Cin,Hout,Wout)
    # (N, KH*KW, Cin, Hout, Wout) -> (N, K, HW); K index = (kh*KW+kw)*Cin + cin
    x_col = jnp.stack(taps, axis=1).reshape(N, K, HW)

    # OIHW -> (Cout, KH, KW, Cin) -> (Cout, K): same (kh, kw, cin) ordering.
    w2d = jnp.transpose(weight_oihw, (0, 2, 3, 1)).reshape(Cout, K)

    out = pl.pallas_call(
        _aspp_matmul_kernel,
        out_shape=jax.ShapeDtypeStruct((N, Cout, HW), x_nchw.dtype),
        grid=(N,),
        in_specs=[
            pl.BlockSpec((1, K, HW), lambda n: (n, 0, 0)),
            pl.BlockSpec((Cout, K), lambda n: (0, 0)),
        ],
        out_specs=pl.BlockSpec((1, Cout, HW), lambda n: (n, 0, 0)),
        compiler_params=pltpu.CompilerParams(
            # Batch axis parallel -> shards across v7x's 2 TensorCores; the
            # ~0.35us/step grid overhead with N=2 is negligible on v5e/v6e.
            dimension_semantics=("parallel",),
        ),
    )(x_col, w2d)

    # (N, Cout, Hout*Wout) -> (N, Cout, Hout, Wout): already NCHW.
    return out.reshape(N, Cout, Hout, Wout)


if __name__ == "__main__":
    # Module config (typical ASPP dilated branch, small sizes).
    inplanes, planes = 4, 8
    kernel_size, padding, dilation = 3, 2, 2
    N, H, W = 2, 16, 16

    key = jax.random.PRNGKey(0)
    x = jax.random.normal(key, (N, inplanes, H, W), dtype=jnp.float32)

    # _init_weight fills Conv2d weights with 1.0; bias=False.
    weight = jnp.ones(
        (planes, inplanes, kernel_size, kernel_size), dtype=jnp.float32
    )

    out = aspp_module_gt(x, weight, padding=padding, dilation=dilation)
    out = jax.block_until_ready(out)

    # Reference check with XLA's conv (same semantics as nn.Conv2d, bias=False).
    ref = lax.conv_general_dilated(
        x,
        weight,
        window_strides=(1, 1),
        padding=((padding, padding), (padding, padding)),
        rhs_dilation=(dilation, dilation),
        dimension_numbers=("NCHW", "OIHW", "NCHW"),
    )
    assert out.shape == (N, planes, H, W), out.shape
    assert jnp.allclose(out, ref, atol=1e-4, rtol=1e-4), "mismatch vs reference conv"

    print("KERNEL_OK")
</pallas_src>

<mosaic_0001>
module attributes {stable_mosaic.version = 11 : i64} {
  func.func @_aspp_matmul_kernel(%arg0: i32, %arg1: memref<1x36x256xf32, #tpu.memory_space<vmem>>, %arg2: memref<8x36xf32, #tpu.memory_space<vmem>>, %arg3: memref<1x8x256xf32, #tpu.memory_space<vmem>>) attributes {dimension_semantics = [#tpu.dimension_semantics<parallel>], iteration_bounds = array<i64: 2>, scalar_prefetch = 0 : i64, scratch_operands = 0 : i64, tpu.core_type = #tpu.core_type<tc>, window_params = [{transform_indices = @transform_0, window_bounds = array<i64: 1, 36, 256>}, {pipeline_mode = #tpu.pipeline_mode<synchronous>, transform_indices = @transform_1, window_bounds = array<i64: 8, 36>}, {transform_indices = @transform_2, window_bounds = array<i64: 1, 8, 256>}]} {
    %c0 = arith.constant 0 : index
    %c0_0 = arith.constant 0 : index
    %0 = vector.load %arg2[%c0, %c0_0] : memref<8x36xf32, #tpu.memory_space<vmem>>, vector<8x36xf32>
    %c0_1 = arith.constant 0 : index
    %c0_2 = arith.constant 0 : index
    %c0_3 = arith.constant 0 : index
    %1 = vector.load %arg1[%c0_1, %c0_2, %c0_3] : memref<1x36x256xf32, #tpu.memory_space<vmem>>, vector<1x36x256xf32>
    %2 = vector.shape_cast %1 : vector<1x36x256xf32> to vector<36x256xf32>
    %cst = arith.constant dense<0.000000e+00> : vector<8x256xf32>
    %3 = tpu.matmul %0, %2, %cst {dimension_numbers = #tpu.dot_dimension_numbers<[1], [0], [0], [1], [0, 0, 1, 1], [], []>} : vector<8x36xf32>, vector<36x256xf32>, vector<8x256xf32> -> vector<8x256xf32>
    %c0_4 = arith.constant 0 : index
    %c0_5 = arith.constant 0 : index
    %c0_6 = arith.constant 0 : index
    %4 = vector.load %arg3[%c0_4, %c0_5, %c0_6] : memref<1x8x256xf32, #tpu.memory_space<vmem>>, vector<1x8x256xf32>
    %5 = vector.shape_cast %4 : vector<1x8x256xf32> to vector<8x256xf32>
    %6 = vector.shape_cast %3 : vector<8x256xf32> to vector<1x8x256xf32>
    tpu.vector_store %arg3[%c0_4, %c0_5, %c0_6], %6 {strides = array<i32>} : memref<1x8x256xf32, #tpu.memory_space<vmem>>, vector<1x8x256xf32>,
    return
  }
  func.func @transform_0(%arg0: i32) -> (i32, i32, i32) {
    %c0_i32 = arith.constant 0 : i32
    %c0_i32_0 = arith.constant 0 : i32
    %c0_i32_1 = arith.constant 0 : i32
    return %arg0, %c0_i32, %c0_i32_0 : i32, i32, i32
  }
  func.func @transform_1(%arg0: i32) -> (i32, i32) {
    %c0_i32 = arith.constant 0 : i32
    %c0_i32_0 = arith.constant 0 : i32
    %c0_i32_1 = arith.constant 0 : i32
    return %c0_i32, %c0_i32_0 : i32, i32
  }
  func.func @transform_2(%arg0: i32) -> (i32, i32, i32) {
    %c0_i32 = arith.constant 0 : i32
    %c0_i32_0 = arith.constant 0 : i32
    %c0_i32_1 = arith.constant 0 : i32
    return %arg0, %c0_i32, %c0_i32_0 : i32, i32, i32
  }
}

</mosaic_0001>

<llo_original>
// kernel: aspp_module_gt.1
$region0: #{aspp_module_gt.1}
  #allocation0 [shape = 'u32[]', space=smem, size = 0x4, offset = 0x4, fixed_abs, tag = 'smem constant byte address 0x4 - core index']
  #allocation1 [shape = 'u32[144,128]{1,0:T(1,128)}', space=vmem, size = 0x12000, scoped, tag = 'internal scratch']
  %s0 = inlined_call_operand.vmem [shape: f32[2,36,256], index: 0, kind: input, shape index: {}]
  %s1 = inlined_call_operand.vmem [shape: f32[8,36], index: 1, kind: input, shape index: {}]
  %s2 = inlined_call_operand.vmem [shape: f32[2,8,256], index: 2, kind: output, shape index: {}]
  %s3 = sld [smem:[#allocation0]]
  $region41: #{aspp_module_gt.1} parent=0
    _
  %s5 = ssub.s32 1, %s3
  %s6 = scalar_select 0, %s5, %s3
  loop: start=0, step=1, limit=4
  $region2: #{aspp_module_gt.1} parent=0 // loop_pre_header
    _
  $region3: #{aspp_module_gt.1} parent=0 // loop_header
    %s8 = sphi 0, %s12
    %p9 = scmp.ge.s32.totalorder %s8, 4
    %s18 = sphi 0, %s20
    %s21 = sphi 0, %s18
    %s22 = sphi 0, %s21
    %s38 = sphi 0, %s22
    %s42 = sphi 0, %s42
    %s44 = sphi 0, %s42
    %s45 = sphi 0, %s44
    %s59 = sphi 0, %s45
    %s65 = sphi 0, %s67
    %s68 = sphi 0, %s65
    %s69 = sphi 0, %s68
    %s85 = sphi 0, %s69
  $region4: #{aspp_module_gt.1} parent=0 // loop_header_branch
    %11 = sbr.rel (%p9) target = $region8
  $region5: #{aspp_module_gt.1} parent=0 // loop_body
    %s13 = ssub.s32 %s8, 1
    %s14 = ssub.s32 %s8, 2
    %s15 = sadd.s32 %s8, 1
    %s16 = ssub.s32 %s8, %s15
    %p17 = scmp.eq.s32.totalorder %s16, 0
    %s19 = sadd.s32 %s18, 1
    %s20 = scalar_select %p17, %s18, %s19
    %p23 = pneg %p17
    %p24 = scmp.eq.s32.totalorder %s8, 1
    %p25 = por %p23, %p24
    %p26 = scmp.ne.s32.totalorder %s18, %s21
    %p27 = scmp.eq.s32.totalorder %s8, 0
    %p28 = por %p26, %p27
    %p29 = scmp.ne.s32.totalorder %s18, %s21
    %p30 = scmp.eq.s32.totalorder %s13, 1
    %p31 = por %p29, %p30
    %p32 = scmp.ne.s32.totalorder %s21, %s22
    %p33 = scmp.eq.s32.totalorder %s13, 0
    %p34 = por %p32, %p33
    %p35 = scmp.ne.s32.totalorder %s21, %s22
    %p36 = scmp.eq.s32.totalorder %s14, 1
    %p37 = por %p35, %p36
    %p39 = scmp.ne.s32.totalorder %s22, %s38
    %p40 = scmp.eq.s32.totalorder %s14, 0
    %p41 = por %p39, %p40
    %s43 = sadd.s32 %s42, 1
    %p46 = scmp.eq.s32.totalorder %s8, 1
    %p47 = scmp.ne.s32.totalorder %s42, %s44
    %p48 = scmp.eq.s32.totalorder %s8, 0
    %p49 = por %p47, %p48
    %p50 = scmp.ne.s32.totalorder %s42, %s44
    %p51 = scmp.eq.s32.totalorder %s13, 1
    %p52 = por %p50, %p51
    %p53 = scmp.ne.s32.totalorder %s44, %s45
    %p54 = scmp.eq.s32.totalorder %s13, 0
    %p55 = por %p53, %p54
    %p56 = scmp.ne.s32.totalorder %s44, %s45
    %p57 = scmp.eq.s32.totalorder %s14, 1
    %p58 = por %p56, %p57
    %p60 = scmp.ne.s32.totalorder %s45, %s59
    %p61 = scmp.eq.s32.totalorder %s14, 0
    %p62 = por %p60, %p61
    %s63 = ssub.s32 %s8, %s15
    %p64 = scmp.eq.s32.totalorder %s63, 0
    %s66 = sadd.s32 %s65, 1
    %s67 = scalar_select %p64, %s65, %s66
    %p70 = pneg %p64
    %p71 = scmp.eq.s32.totalorder %s8, 1
    %p72 = por %p70, %p71
    %p73 = scmp.ne.s32.totalorder %s65, %s68
    %p74 = scmp.eq.s32.totalorder %s8, 0
    %p75 = por %p73, %p74
    %p76 = scmp.ne.s32.totalorder %s65, %s68
    %p77 = scmp.eq.s32.totalorder %s13, 1
    %p78 = por %p76, %p77
    %p79 = scmp.ne.s32.totalorder %s68, %s69
    %p80 = scmp.eq.s32.totalorder %s13, 0
    %p81 = por %p79, %p80
    %p82 = scmp.ne.s32.totalorder %s68, %s69
    %p83 = scmp.eq.s32.totalorder %s14, 1
    %p84 = por %p82, %p83
    %p86 = scmp.ne.s32.totalorder %s69, %s85
    %p87 = scmp.eq.s32.totalorder %s14, 0
    %p88 = por %p86, %p87
    %p89 = scmp.le.s32.totalorder 1, %s8
    %p90 = scmp.lt.s32.totalorder %s8, 3
    %p91 = pnand %p89, %p90
    %p92 = pneg %p91
    // Predicated region
    $region9: #{aspp_module_gt.1} parent=5 // pred_check
      _
    $region10: #{aspp_module_gt.1} parent=5 // pred_check_branch
      %94 = sbr.rel (%p91) target = $region12
    $region11: #{aspp_module_gt.1} parent=5 // pred_region
      %s95 = ssub.s32 %s8, 1
      // Predicated region
      $region13: #{aspp_module_gt.1} parent=11 // pred_check
        %p96 = pneg %p55
      $region14: #{aspp_module_gt.1} parent=11 // pred_check_branch
        %98 = sbr.rel (%p96) target = $region16
      $region15: #{aspp_module_gt.1} parent=11 // pred_region
        _
      $region16: #{aspp_module_gt.1} parent=11 // pred_fallthru
        _
    $region12: #{aspp_module_gt.1} parent=5 // pred_fallthru
      _
    %p99 = scmp.lt.s32.totalorder %s8, 2
    // Predicated region
    $region17: #{aspp_module_gt.1} parent=5 // pred_check
      %p100 = pneg %p99
    $region18: #{aspp_module_gt.1} parent=5 // pred_check_branch
      %102 = sbr.rel (%p100) target = $region20
    $region19: #{aspp_module_gt.1} parent=5 // pred_region
      // Predicated region
      $region21: #{aspp_module_gt.1} parent=19 // pred_check
        %p103 = pneg %p28
      $region22: #{aspp_module_gt.1} parent=19 // pred_check_branch
        %105 = sbr.rel (%p103) target = $region24
      $region23: #{aspp_module_gt.1} parent=19 // pred_region
        %p106 = scmp.lt.s32.totalorder %s8, 1
        %s107 = scalar_select %p106, %s8, 1
        %s108 = smul.addr %s107, 10
        %s109 = smul.addr %s108, 8
        %s110 = scalar_lea.vmem %s0, %s109
      $region24: #{aspp_module_gt.1} parent=19 // pred_fallthru
        _
    $region20: #{aspp_module_gt.1} parent=5 // pred_fallthru
      _
    %p111 = scmp.le.s32.totalorder 1, %s8
    %p112 = scmp.lt.s32.totalorder %s8, 3
    %p113 = pnand %p111, %p112
    %p114 = pneg %p113
    // Predicated region
    $region25: #{aspp_module_gt.1} parent=5 // pred_check
      _
    $region26: #{aspp_module_gt.1} parent=5 // pred_check_branch
      %116 = sbr.rel (%p113) target = $region28
    $region27: #{aspp_module_gt.1} parent=5 // pred_region
      %s117 = ssub.s32 %s8, 1
      %p118 = scmp.lt.s32.totalorder %s13, 1
      %s119 = scalar_select %p118, %s13, 1
      %s120 = smul.addr %s119, 10
      %s121 = smul.addr %s120, 8
      %s122 = scalar_lea.vmem %s0, %s121
      %p123 = pneg %p34
      %p124 = pneg %p31
      %p125 = pneg %p55
      %p126 = pneg %p52
      %p127 = pneg %p81
      %p128 = pneg %p78
      %p129 = scmp.lt.s32.totalorder %s13, 1
      %s130 = scalar_select %p129, %s13, 1
      %s131 = smul.addr %s130, 2
      %s132 = smul.addr %s131, 8
      %s133 = scalar_lea.vmem %s2, %s132
      %p134 = scmp.lt.s32.totalorder %s13, 1
      %s135 = scalar_select %p134, %s13, 1
      %s136 = smul.addr %s135, 10
      %s137 = smul.addr %s136, 8
      %s138 = scalar_lea.vmem %s0, %s137
      %p139 = scmp.lt.s32.totalorder %s13, 1
      %s140 = scalar_select %p139, %s13, 1
      %s141 = smul.addr %s140, 2
      %s142 = smul.addr %s141, 8
      %s143 = scalar_lea.vmem %s2, %s142
      %v144 = vld [vmem:[%s1] sm:$0xff]
      %v145 = vld [vmem:[%s138] sm:$0xff]
      %v146 = vld [vmem:[%s138 + $0x8] sm:$0xff]
      %v147 = vld [vmem:[%s138 + $0x10] sm:$0xff]
      %v148 = vld [vmem:[%s138 + $0x18] sm:$0xff]
      %v149 = vld [vmem:[%s138 + $0x20] sm:$0xff]
      %v150 = vld [vmem:[%s138 + $0x28] sm:$0xff]
      %v151 = vld [vmem:[%s138 + $0x30] sm:$0xff]
      %v152 = vld [vmem:[%s138 + $0x38] sm:$0xff]
      %v153 = vld [vmem:[%s138 + $0x40] sm:$0xf]
      %v154 = vld [vmem:[%s138 + $0x48] sm:$0xf]
      %vm155 = vcmask 293888
      %v157 = vsel %vm155, %v144, 0
      %vm159 = vcmask 1043456
      %v161 = vsel %vm159, %v153, 0
      %v164 = vsel %vm159, %v154, 0
      %166 = vmatprep.subr.mxu0 %v146
      %167 = vmatpush1.msra.mxu0 %v145
      %168 = vmatprep.subr.mxu0 %v148
      %169 = vmatpush1.msra.mxu0 %v147
      %170 = vmatprep.subr.mxu0 %v150
      %171 = vmatpush1.msra.mxu0 %v149
      %172 = vmatprep.subr.mxu0 %v152
      %173 = vmatpush1.msra.mxu0 %v151
      %174 = vmatprep.subr.mxu0 %v164
      %175 = vmatpush1.msra.mxu0 %v161
      %176 = vmatprep.subr.mxu0 0.0
      %177 = vmatpush1.msra.mxu0 0.0
      %178 = vmatprep.subr.mxu0 0.0
      %179 = vmatpush1.msra.mxu0 0.0
      %180 = vmatprep.subr.mxu0 0.0
      %181 = vmatpush1.msra.mxu0 0.0
      %182 = vmatprep.subr.mxu0 0.0
      %183 = vmatpush1.msra.mxu0 0.0
      %184 = vmatprep.subr.mxu0 0.0
      %185 = vmatpush1.msra.mxu0 0.0
      %186 = vmatprep.subr.mxu0 0.0
      %187 = vmatpush1.msra.mxu0 0.0
      %188 = vmatprep.subr.mxu0 0.0
      %189 = vmatpush1.msra.mxu0 0.0
      %190 = vmatprep.subr.mxu0 0.0
      %191 = vmatpush1.msra.mxu0 0.0
      %192 = vmatprep.subr.mxu0 0.0
      %193 = vmatpush1.msra.mxu0 0.0
      %194 = vmatprep.subr.mxu0 0.0
      %195 = vmatpush1.msra.mxu0 0.0
      %196 = vmatprep.subr.mxu0 0.0
      %197 = vmatpush1.msra.mxu0 0.0
      %198 = vmatprep.subr.mxu0 0.0
      %199 = vmatpush1.msra.mxu0 0.0
      %200 = vmatprep.subr.mxu0 0.0
      %201 = vmatpush1.msra.mxu0 0.0
      %202 = vmatprep.subr.mxu0 0.0
      %203 = vmatpush1.msra.mxu0 0.0
      %204 = vmatprep.subr.mxu0 0.0
      %205 = vmatpush1.msra.mxu0 0.0
      %206 = vmatprep.subr.mxu0 0.0
      %207 = vmatpush1.msra.mxu0 0.0
      %208 = vmatprep.subr.mxu0 0.0
      %209 = vmatpush1.msra.mxu0 0.0
      %210 = vmatprep.subr.mxu0 0.0
      %211 = vmatpush1.msra.mxu0 0.0
      %212 = vmatprep.subr.mxu0 0.0
      %213 = vmatpush1.msra.mxu0 0.0
      %214 = vmatprep.subr.mxu0 0.0
      %215 = vmatpush1.msra.mxu0 0.0
      %216 = vmatprep.subr.mxu0 0.0
      %217 = vmatpush1.msra.mxu0 0.0
      %218 = vmatprep.subr.mxu0 0.0
      %219 = vmatpush1.msra.mxu0 0.0
      %220 = vmatprep.subr.mxu0 0.0
      %221 = vmatpush1.msra.mxu0 0.0
      %222 = vmatprep.subr.mxu0 0.0
      %223 = vmatpush1.msra.mxu0 0.0
      %224 = vmatprep.subr.mxu0 0.0
      %225 = vmatpush1.msra.mxu0 0.0
      %226 = vmatprep.subr.mxu0 0.0
      %227 = vmatpush1.msra.mxu0 0.0
      %228 = vmatprep.subr.mxu0 0.0
      %229 = vmatpush1.msra.mxu0 0.0
      %230 = vmatprep.mubr.f32.mxu0 0.0
      %231 = vmatmul.mubr.f32.gmra.mrb[0].mxu0 %v157
      %v232 = vpop.f32.mrb[0].mxu0
      %v233 = vadd.f32 0.0, %v232
      %v234 = vpop.f32.mrb[0].mxu0
      %v235 = vadd.f32 0.0, %v234
      %236 = vdwg.mxu0
      %237 = vst [vmem:[%s143] sm:$0xff] %v233
      %238 = vst [vmem:[%s143 + $0x8] sm:$0xff] %v235
      %p239 = scmp.lt.s32.totalorder %s13, 1
      %s240 = scalar_select %p239, %s13, 1
      %s241 = smul.addr %s240, 2
      %s242 = smul.addr %s241, 8
      %s243 = scalar_lea.vmem %s2, %s242
      // Predicated region
      $region29: #{aspp_module_gt.1} parent=27 // pred_check
        %p244 = pneg %p78
      $region30: #{aspp_module_gt.1} parent=27 // pred_check_branch
        %246 = sbr.rel (%p244) target = $region32
      $region31: #{aspp_module_gt.1} parent=27 // pred_region
        _
      $region32: #{aspp_module_gt.1} parent=27 // pred_fallthru
        _
    $region28: #{aspp_module_gt.1} parent=5 // pred_fallthru
      _
    %p247 = scmp.le.s32.totalorder 2, %s8
    // Predicated region
    $region33: #{aspp_module_gt.1} parent=5 // pred_check
      %p248 = pneg %p247
    $region34: #{aspp_module_gt.1} parent=5 // pred_check_branch
      %250 = sbr.rel (%p248) target = $region36
    $region35: #{aspp_module_gt.1} parent=5 // pred_region
      %s251 = ssub.s32 %s8, 2
      // Predicated region
      $region37: #{aspp_module_gt.1} parent=35 // pred_check
        %p252 = pneg %p84
      $region38: #{aspp_module_gt.1} parent=35 // pred_check_branch
        %254 = sbr.rel (%p252) target = $region40
      $region39: #{aspp_module_gt.1} parent=35 // pred_region
        %p255 = scmp.lt.s32.totalorder %s14, 1
        %s256 = scalar_select %p255, %s14, 1
        %s257 = smul.addr %s256, 2
        %s258 = smul.addr %s257, 8
        %s259 = scalar_lea.vmem %s2, %s258
      $region40: #{aspp_module_gt.1} parent=35 // pred_fallthru
        _
    $region36: #{aspp_module_gt.1} parent=5 // pred_fallthru
      _
  $region6: #{aspp_module_gt.1} parent=0 // loop_footer
    %s12 = sadd.s32 1, %s8
  $region7: #{aspp_module_gt.1} parent=0 // loop_footer_branch
    %7 = sbr.rel target = $region3
  $region8: #{aspp_module_gt.1} parent=0 // loop_exit
    _

</llo_original>
